<compile_context>
chip_gen: v7x
topology: tpu7x:2x2x1
jax: 0.10.0
libtpu: 0.0.40
codegen_flags: <defaults>
</compile_context>

<pallas_src>
import functools

import jax
import jax.numpy as jnp
from jax.experimental import pallas as pl
from jax.experimental.pallas import tpu as pltpu

ALPHA = 0.25
GAMMA = 2.0
LANE = 128        # lane width (last dim of every tile)
ACC_ROWS = 8      # f32 accumulator slab rows (one vreg worth of sublanes)
MAX_TM = 4096     # max rows per grid step: 4096*128*4B = 2 MiB per f32 tile
NCORES = 2        # shard the reduction across 2 TensorCores (v7x); fine on 1-TC chips


def _min_tile_rows(dtype):
    """Sublane granularity for a dtype: 8 (4-byte), 16 (2-byte), 32 (1-byte)."""
    itemsize = jnp.dtype(dtype).itemsize
    if itemsize >= 4:
        return 8
    if itemsize == 2:
        return 16
    return 32


def _focal_elementwise(p, t, alpha, gamma, binary_targets):
    """Per-element focal loss, f32, trimmed algebra."""
    p = p.astype(jnp.float32)
    t = t.astype(jnp.float32)

    # w = 1 - pt, where pt = p*t + (1-p)*(1-t)
    w = p + t - 2.0 * (p * t)

    if binary_targets:
        # For t in {0,1}: BCE = -log(pt) with PyTorch's clamp at -100.
        neg_bce = jnp.maximum(jnp.log(1.0 - w), -100.0)
    else:
        log_p = jnp.maximum(jnp.log(p), -100.0)
        log_1mp = jnp.maximum(jnp.log(1.0 - p), -100.0)
        neg_bce = t * log_p + (1.0 - t) * log_1mp          # = -BCE

    if gamma == 2.0:
        focal = w * w                                      # avoid pow on the single EUP
    elif gamma == 1.0:
        focal = w
    else:
        focal = w ** gamma

    # neg_alpha_t = -(alpha*t + (1-alpha)*(1-t)); sign cancels with neg_bce.
    neg_alpha_t = (alpha - 1.0) + (1.0 - 2.0 * alpha) * t
    return (neg_alpha_t * focal) * neg_bce


def _focal_loss_kernel(p_ref, t_ref, out_ref, *, alpha, gamma, binary_targets,
                       steps_per_core, needs_mask, first_masked_blk, valid_rows):
    step = pl.program_id(1)

    @pl.when(step == 0)
    def _init():
        out_ref[...] = jnp.zeros_like(out_ref)

    def accumulate(p, t):
        loss = _focal_elementwise(p, t, alpha, gamma, binary_targets)
        tm = loss.shape[0]
        main = (tm // ACC_ROWS) * ACC_ROWS
        if main:
            # vreg-shaped partial sums: pure VALU adds, no per-step XLU reduce.
            out_ref[...] += loss[:main].reshape(main // ACC_ROWS, ACC_ROWS, LANE).sum(axis=0)
        if main < tm:
            # ragged tiny block (block == full array, rows not a multiple of 8)
            out_ref[0:1, :] += loss[main:].sum(axis=0, keepdims=True)

    if not needs_mask:
        accumulate(p_ref[...], t_ref[...])
    else:
        blk = pl.program_id(0) * steps_per_core + step
        tm = p_ref.shape[0]

        @pl.when(blk < first_masked_blk)          # hot path: fully valid block
        def _full():
            accumulate(p_ref[...], t_ref[...])

        @pl.when(blk >= first_masked_blk)         # boundary / fully-OOB steps
        def _tail():
            row = blk * tm + jax.lax.broadcasted_iota(jnp.int32, (tm, LANE), 0)
            valid = row < valid_rows
            # Mask the INPUTS (p=t=0 => loss exactly 0); garbage never hits log.
            p = jnp.where(valid, p_ref[...].astype(jnp.float32), 0.0)
            t = jnp.where(valid, t_ref[...].astype(jnp.float32), 0.0)
            accumulate(p, t)


def focal_loss(probs, targets, alpha=ALPHA, gamma=GAMMA, *,
               binary_targets=False, max_rows_per_step=MAX_TM):
    """Pallas TPU FocalLoss.forward -> scalar mean loss.

    Inputs may be f32 or bf16 (bf16 halves HBM traffic; the kernel upcasts
    in-register).  Set binary_targets=True only if targets are exactly {0,1}.
    """
    assert probs.shape == targets.shape
    total = int(probs.size)
    if total == 0:
        return jnp.float32(float("nan"))

    sub = max(_min_tile_rows(probs.dtype), _min_tile_rows(targets.dtype))

    p_flat = jnp.ravel(probs)
    t_flat = jnp.ravel(targets)
    rem = total % LANE
    if rem:
        # Only non-128-multiple sizes pay a pad copy; zero pads contribute 0.
        pad = LANE - rem
        p_flat = jnp.pad(p_flat, (0, pad))
        t_flat = jnp.pad(t_flat, (0, pad))
    rows = p_flat.size // LANE
    p2d = p_flat.reshape(rows, LANE)
    t2d = t_flat.reshape(rows, LANE)

    # Steps-first sizing: pick the step count, then the smallest sublane-aligned
    # tile covering it (overshoot < sub rows per step, masked in-kernel).
    ncores = NCORES if rows >= 4 * sub else 1
    rpc = pl.cdiv(rows, ncores)
    steps_per_core = pl.cdiv(rpc, max_rows_per_step)
    if ncores == 1 and steps_per_core == 1:
        tm = rows                                  # single block == full array
    else:
        tm = sub * pl.cdiv(rpc, sub * steps_per_core)

    total_steps = ncores * steps_per_core
    blocks_needed = pl.cdiv(rows, tm)
    max_blk = blocks_needed - 1                    # last block with any valid data
    first_masked_blk = blocks_needed if rows % tm == 0 else blocks_needed - 1
    needs_mask = first_masked_blk < total_steps

    kernel = functools.partial(
        _focal_loss_kernel,
        alpha=float(alpha), gamma=float(gamma), binary_targets=bool(binary_targets),
        steps_per_core=steps_per_core, needs_mask=needs_mask,
        first_masked_blk=first_masked_blk, valid_rows=rows)

    # Clamp the DMA block index so steps past the end re-read the last valid
    # block (and get fully masked) instead of issuing an out-of-range DMA.
    in_map = lambda c, i: (jnp.minimum(c * steps_per_core + i, max_blk), 0)

    partials = pl.pallas_call(
        kernel,
        out_shape=jax.ShapeDtypeStruct((ncores * ACC_ROWS, LANE), jnp.float32),
        grid=(ncores, steps_per_core),
        in_specs=[
            pl.BlockSpec((tm, LANE), in_map),
            pl.BlockSpec((tm, LANE), in_map),
        ],
        out_specs=pl.BlockSpec((ACC_ROWS, LANE), lambda c, i: (c, 0)),
        compiler_params=pltpu.CompilerParams(
            dimension_semantics=("parallel", "arbitrary"),
            vmem_limit_bytes=32 * 1024 * 1024),
    )(p2d, t2d)

    return jnp.sum(partials) / float(total)


def focal_loss_ref(probs, targets, alpha=ALPHA, gamma=GAMMA):
    """Pure-JAX reference matching the PyTorch module."""
    p = probs.astype(jnp.float32)
    t = targets.astype(jnp.float32)
    log_p = jnp.maximum(jnp.log(p), -100.0)
    log_1mp = jnp.maximum(jnp.log(1.0 - p), -100.0)
    bce = -(t * log_p + (1.0 - t) * log_1mp)
    pt = p * t + (1.0 - p) * (1.0 - t)
    loss = ((1.0 - pt) ** gamma) * bce
    loss = alpha * t * loss + (1.0 - alpha) * (1.0 - t) * loss
    return loss.mean()


if __name__ == "__main__":
    key = jax.random.PRNGKey(0)
    kp, kt = jax.random.split(key)

    # Headline NCHW shape (sigmoid-probability inputs + binary targets).
    shape = (2, 4, 16, 16)
    probs = jax.nn.sigmoid(jax.random.normal(kp, shape, dtype=jnp.float32))
    targets = (jax.random.uniform(kt, shape) > 0.5).astype(jnp.float32)

    out = jax.block_until_ready(focal_loss(probs, targets))
    ref = focal_loss_ref(probs, targets)
    assert jnp.allclose(out, ref, rtol=1e-5, atol=2e-6), (out, ref)

    # Binary-target fast path (single log) on the same data.
    out_bin = jax.block_until_ready(focal_loss(probs, targets, binary_targets=True))
    assert jnp.allclose(out_bin, ref, rtol=1e-5, atol=2e-6), (out_bin, ref)

    # numel not a multiple of 128 (exercises the lane-pad path).
    shape2 = (2, 3, 7, 5)
    p2 = jax.nn.sigmoid(jax.random.normal(kp, shape2, dtype=jnp.float32))
    t2 = (jax.random.uniform(kt, shape2) > 0.5).astype(jnp.float32)
    out2 = jax.block_until_ready(focal_loss(p2, t2))
    ref2 = focal_loss_ref(p2, t2)
    assert jnp.allclose(out2, ref2, rtol=1e-5, atol=2e-6), (out2, ref2)

    # Multi-step grid + 2-core split + in-kernel tail masking + clamped
    # fully-out-of-range step (small max_rows_per_step to exercise the path).
    shape3 = (3, 5, 24, 24)
    p3 = jax.nn.sigmoid(jax.random.normal(kp, shape3, dtype=jnp.float32))
    t3 = (jax.random.uniform(kt, shape3) > 0.5).astype(jnp.float32)
    out3 = jax.block_until_ready(focal_loss(p3, t3, max_rows_per_step=16))
    ref3 = focal_loss_ref(p3, t3)
    assert jnp.allclose(out3, ref3, rtol=1e-5, atol=2e-6), (out3, ref3)

    print("KERNEL_OK")
</pallas_src>

<mosaic_0001>
module attributes {stable_mosaic.version = 11 : i64} {
  func.func @_focal_loss_kernel(%arg0: i32, %arg1: i32, %arg2: memref<16x128xf32, #tpu.memory_space<vmem>>, %arg3: memref<16x128xf32, #tpu.memory_space<vmem>>, %arg4: memref<8x128xf32, #tpu.memory_space<vmem>>) attributes {dimension_semantics = [#tpu.dimension_semantics<parallel>, #tpu.dimension_semantics<arbitrary>], iteration_bounds = array<i64: 1, 1>, scalar_prefetch = 0 : i64, scratch_operands = 0 : i64, tpu.core_type = #tpu.core_type<tc>, window_params = [{transform_indices = @transform_0, window_bounds = array<i64: 16, 128>}, {transform_indices = @transform_1, window_bounds = array<i64: 16, 128>}, {transform_indices = @transform_2, window_bounds = array<i64: 8, 128>}]} {
    %c0_i32 = arith.constant 0 : i32
    %0 = arith.cmpi eq, %arg1, %c0_i32 : i32
    %1 = arith.extui %0 : i1 to i32
    %c0_i32_0 = arith.constant 0 : i32
    %2 = arith.cmpi ne, %1, %c0_i32_0 : i32
    scf.if %2 {
      %cst_15 = arith.constant 0.000000e+00 : f32
      %35 = vector.broadcast %cst_15 : f32 to vector<8x128xf32>
      %c0_16 = arith.constant 0 : index
      %c0_17 = arith.constant 0 : index
      %36 = vector.load %arg4[%c0_16, %c0_17] : memref<8x128xf32, #tpu.memory_space<vmem>>, vector<8x128xf32>
      tpu.vector_store %arg4[%c0_16, %c0_17], %35 {strides = array<i32>} : memref<8x128xf32, #tpu.memory_space<vmem>>, vector<8x128xf32>,
    } else {
    }
    %c0 = arith.constant 0 : index
    %c0_1 = arith.constant 0 : index
    %3 = vector.load %arg2[%c0, %c0_1] : memref<16x128xf32, #tpu.memory_space<vmem>>, vector<16x128xf32>
    %c0_2 = arith.constant 0 : index
    %c0_3 = arith.constant 0 : index
    %4 = vector.load %arg3[%c0_2, %c0_3] : memref<16x128xf32, #tpu.memory_space<vmem>>, vector<16x128xf32>
    %5 = arith.addf %3, %4 : vector<16x128xf32>
    %6 = arith.mulf %3, %4 : vector<16x128xf32>
    %cst = arith.constant 2.000000e+00 : f32
    %7 = vector.broadcast %cst : f32 to vector<16x128xf32>
    %8 = arith.mulf %7, %6 : vector<16x128xf32>
    %9 = arith.subf %5, %8 : vector<16x128xf32>
    %10 = math.log %3 : vector<16x128xf32>
    %cst_4 = arith.constant -1.000000e+02 : f32
    %11 = vector.broadcast %cst_4 : f32 to vector<16x128xf32>
    %12 = arith.maximumf %10, %11 : vector<16x128xf32>
    %cst_5 = arith.constant 1.000000e+00 : f32
    %13 = vector.broadcast %cst_5 : f32 to vector<16x128xf32>
    %14 = arith.subf %13, %3 : vector<16x128xf32>
    %15 = math.log %14 : vector<16x128xf32>
    %cst_6 = arith.constant -1.000000e+02 : f32
    %16 = vector.broadcast %cst_6 : f32 to vector<16x128xf32>
    %17 = arith.maximumf %15, %16 : vector<16x128xf32>
    %18 = arith.mulf %4, %12 : vector<16x128xf32>
    %cst_7 = arith.constant 1.000000e+00 : f32
    %19 = vector.broadcast %cst_7 : f32 to vector<16x128xf32>
    %20 = arith.subf %19, %4 : vector<16x128xf32>
    %21 = arith.mulf %20, %17 : vector<16x128xf32>
    %22 = arith.addf %18, %21 : vector<16x128xf32>
    %23 = arith.mulf %9, %9 : vector<16x128xf32>
    %cst_8 = arith.constant 5.000000e-01 : f32
    %24 = vector.broadcast %cst_8 : f32 to vector<16x128xf32>
    %25 = arith.mulf %24, %4 : vector<16x128xf32>
    %cst_9 = arith.constant -7.500000e-01 : f32
    %26 = vector.broadcast %cst_9 : f32 to vector<16x128xf32>
    %27 = arith.addf %26, %25 : vector<16x128xf32>
    %28 = arith.mulf %27, %23 : vector<16x128xf32>
    %29 = arith.mulf %28, %22 : vector<16x128xf32>
    %c0_10 = arith.constant 0 : index
    %c0_11 = arith.constant 0 : index
    %30 = vector.load %arg4[%c0_10, %c0_11] : memref<8x128xf32, #tpu.memory_space<vmem>>, vector<8x128xf32>
    %31 = vector.shape_cast %29 : vector<16x128xf32> to vector<2x8x128xf32>
    %cst_12 = arith.constant dense<0.000000e+00> : vector<8x128xf32>
    %32 = vector.multi_reduction <add>, %31, %cst_12 [0] : vector<2x8x128xf32> to vector<8x128xf32>
    %33 = arith.addf %30, %32 : vector<8x128xf32>
    %c0_13 = arith.constant 0 : index
    %c0_14 = arith.constant 0 : index
    %34 = vector.load %arg4[%c0_13, %c0_14] : memref<8x128xf32, #tpu.memory_space<vmem>>, vector<8x128xf32>
    tpu.vector_store %arg4[%c0_13, %c0_14], %33 {strides = array<i32>} : memref<8x128xf32, #tpu.memory_space<vmem>>, vector<8x128xf32>,
    return
  }
  func.func @transform_0(%arg0: i32, %arg1: i32) -> (i32, i32) {
    %c1_i32 = arith.constant 1 : i32
    %0 = arith.muli %arg0, %c1_i32 : i32
    %1 = arith.addi %0, %arg1 : i32
    %c0_i32 = arith.constant 0 : i32
    %2 = arith.minsi %1, %c0_i32 : i32
    %c0_i32_0 = arith.constant 0 : i32
    %c0_i32_1 = arith.constant 0 : i32
    return %2, %c0_i32_0 : i32, i32
  }
  func.func @transform_1(%arg0: i32, %arg1: i32) -> (i32, i32) {
    %c1_i32 = arith.constant 1 : i32
    %0 = arith.muli %arg0, %c1_i32 : i32
    %1 = arith.addi %0, %arg1 : i32
    %c0_i32 = arith.constant 0 : i32
    %2 = arith.minsi %1, %c0_i32 : i32
    %c0_i32_0 = arith.constant 0 : i32
    %c0_i32_1 = arith.constant 0 : i32
    return %2, %c0_i32_0 : i32, i32
  }
  func.func @transform_2(%arg0: i32, %arg1: i32) -> (i32, i32) {
    %c0_i32 = arith.constant 0 : i32
    %c0_i32_0 = arith.constant 0 : i32
    return %arg0, %c0_i32 : i32, i32
  }
}

</mosaic_0001>

<llo_original>
// kernel: tpu_custom_call.1
$region0: #{tpu_custom_call.1}
  #allocation0 [shape = 'u32[]', space=smem, size = 0x4, offset = 0x4, fixed_abs, tag = 'smem constant byte address 0x4 - core index']
  #allocation1 [shape = 'u32[144,128]{1,0:T(1,128)}', space=vmem, size = 0x12000, scoped, tag = 'internal scratch']
  %s0 = inlined_call_operand.hbm [shape: f32[16,128], index: 0, kind: input, shape index: {}]
  %s1 = inlined_call_operand.hbm [shape: f32[16,128], index: 1, kind: input, shape index: {}]
  %s2 = inlined_call_operand.hbm [shape: f32[8,128], index: 2, kind: output, shape index: {}]
  %s3 = sld [smem:[#allocation0]]
  $region30: #{tpu_custom_call.1} parent=0
    _
  %s5 = ssub.s32 1, %s3
  %s6 = scalar_select 0, %s5, %s3
  $region1: #{tpu_custom_call.1} parent=0
    #allocation2 [shape = 'u8[8192]{0}', space=vmem, size = 0x2000, scoped, tag = 'input window, operand 0, single buffered']
    #allocation3 [shape = 's32[1]{0}', space=sflag, size = 0x4, scoped, tag = 'scoped memory for tpu_custom_call.1']
    #allocation4 [shape = 's32[1]{0}', space=sflag, size = 0x4, scoped, tag = 'scoped memory for tpu_custom_call.1']
    #allocation5 [shape = 'u8[8192]{0}', space=vmem, size = 0x2000, scoped, tag = 'input window, operand 1, single buffered']
    #allocation6 [shape = 's32[1]{0}', space=sflag, size = 0x4, scoped, tag = 'scoped memory for tpu_custom_call.1']
    #allocation7 [shape = 'u8[4096]{0}', space=vmem, size = 0x1000, scoped, tag = 'output window, operand 0, single buffered']
    %7 = vsyncpa [#allocation3], 0
    %8 = vsyncpa [#allocation6], 0
    %9 = vsyncpa [#allocation4], 0
    // Predicated region
    $region2: #{tpu_custom_call.1} parent=1 // pred_check
      _
    $region3: #{tpu_custom_call.1} parent=1 // pred_check_branch
      %11 = sbr.rel (0) target = $region5
    $region4: #{tpu_custom_call.1} parent=1 // pred_region
      %s12 = sadd.s32 0, 0
      %p13 = scmp.lt.s32.totalorder %s12, 0
      %s14 = scalar_select %p13, %s12, 0
      %s15 = smul.u32 2, %s14
      %s17 = ssub.s32 256, 256
      %18 = vsyncadd [#allocation3], %s17
      %s19 = smul.addr %s15, 128
      %s20 = scalar_lea.hbm %s0, %s19
      %s21 = sshll.u32 [#allocation2], 4
      %s22 = int_to_ptr.vmem [resolvable:$true] %s21
      %27 = dma.hbm_to_vmem [thread:$0]  %s20, 256, %s22, [#allocation3], 128, 128, 8
    $region5: #{tpu_custom_call.1} parent=1 // pred_fallthru
      _
    // Predicated region
    $region6: #{tpu_custom_call.1} parent=1 // pred_check
      _
    $region7: #{tpu_custom_call.1} parent=1 // pred_check_branch
      %29 = sbr.rel (0) target = $region9
    $region8: #{tpu_custom_call.1} parent=1 // pred_region
      %s30 = sadd.s32 0, 0
      %p31 = scmp.lt.s32.totalorder %s30, 0
      %s32 = scalar_select %p31, %s30, 0
      %s33 = smul.u32 2, %s32
      %s35 = ssub.s32 256, 256
      %36 = vsyncadd [#allocation6], %s35
      %s37 = smul.addr %s33, 128
      %s38 = scalar_lea.hbm %s1, %s37
      %s39 = sshll.u32 [#allocation5], 4
      %s40 = int_to_ptr.vmem [resolvable:$true] %s39
      %45 = dma.hbm_to_vmem [thread:$0]  %s38, 256, %s40, [#allocation6], 128, 128, 8
    $region9: #{tpu_custom_call.1} parent=1 // pred_fallthru
      _
    // Predicated region
    $region10: #{tpu_custom_call.1} parent=1 // pred_check
      _
    $region11: #{tpu_custom_call.1} parent=1 // pred_check_branch
      %47 = sbr.rel (0) target = $region13
    $region12: #{tpu_custom_call.1} parent=1 // pred_region
      %48 = dma.done [#allocation3], 256
    $region13: #{tpu_custom_call.1} parent=1 // pred_fallthru
      _
    // Predicated region
    $region14: #{tpu_custom_call.1} parent=1 // pred_check
      _
    $region15: #{tpu_custom_call.1} parent=1 // pred_check_branch
      %50 = sbr.rel (0) target = $region17
    $region16: #{tpu_custom_call.1} parent=1 // pred_region
      %51 = dma.done [#allocation6], 256
    $region17: #{tpu_custom_call.1} parent=1 // pred_fallthru
      _
    %s52 = sadd.s32 0, 0
    %p53 = scmp.lt.s32.totalorder %s52, 0
    %s54 = scalar_select %p53, %s52, 0
    %s55 = smul.u32 2, %s54
    %s56 = sadd.s32 0, 0
    %p57 = scmp.lt.s32.totalorder %s56, 0
    %s58 = scalar_select %p57, %s56, 0
    %s59 = smul.u32 2, %s58
    %p60 = scmp.eq.s32.totalorder 0, 0
    // Predicated region
    $region18: #{tpu_custom_call.1} parent=1 // pred_check
      %p61 = pneg %p60
    $region19: #{tpu_custom_call.1} parent=1 // pred_check_branch
      %63 = sbr.rel (%p61) target = $region21
    $region20: #{tpu_custom_call.1} parent=1 // pred_region
      %64 = vst [vmem:[#allocation7] sm:$0xff] 0.0
    $region21: #{tpu_custom_call.1} parent=1 // pred_fallthru
      _
    %v65 = vld [vmem:[#allocation2] sm:$0xff]
    %v66 = vld [vmem:[#allocation2 + $0x8] sm:$0xff]
    %v67 = vld [vmem:[#allocation5] sm:$0xff]
    %v68 = vld [vmem:[#allocation5 + $0x8] sm:$0xff]
    %v69 = vadd.f32 %v65, %v67
    %v70 = vadd.f32 %v66, %v68
    %v71 = vmul.f32 %v65, %v67
    %v72 = vmul.f32 %v66, %v68
    %v73 = vmul.f32 %v71, 2.0
    %v74 = vmul.f32 %v72, 2.0
    %v75 = vsub.f32 %v69, %v73
    %v76 = vsub.f32 %v70, %v74
    %v77 = vlog2.pop %v65
    %v78 = vmul.f32 %v77, 0.6931472
    %v79 = vlog2.pop %v66
    %v80 = vmul.f32 %v79, 0.6931472
    %v81 = vmax.f32 %v78, -100.0
    %v82 = vmax.f32 %v80, -100.0
    %v83 = vsub.f32 1.0, %v65
    %v84 = vsub.f32 1.0, %v66
    %v85 = vlog2.pop %v83
    %v86 = vmul.f32 %v85, 0.6931472
    %v87 = vlog2.pop %v84
    %v88 = vmul.f32 %v87, 0.6931472
    %v89 = vmax.f32 %v86, -100.0
    %v90 = vmax.f32 %v88, -100.0
    %v91 = vmul.f32 %v67, %v81
    %v92 = vmul.f32 %v68, %v82
    %v93 = vsub.f32 1.0, %v67
    %v94 = vsub.f32 1.0, %v68
    %v95 = vmul.f32 %v93, %v89
    %v96 = vmul.f32 %v94, %v90
    %v97 = vadd.f32 %v91, %v95
    %v98 = vadd.f32 %v92, %v96
    %v99 = vmul.f32 %v75, %v75
    %v100 = vmul.f32 %v76, %v76
    %v101 = vmul.f32 %v67, 0.5
    %v102 = vmul.f32 %v68, 0.5
    %v103 = vadd.f32 %v101, -0.75
    %v104 = vadd.f32 %v102, -0.75
    %v105 = vmul.f32 %v103, %v99
    %v106 = vmul.f32 %v104, %v100
    %v107 = vmul.f32 %v105, %v97
    %v108 = vmul.f32 %v106, %v98
    %v109 = vld [vmem:[#allocation7] sm:$0xff]
    %v110 = vadd.f32 %v107, %v108
    %v111 = vadd.f32 %v109, %v110
    %112 = vst [vmem:[#allocation7] sm:$0xff] %v111
    // Predicated region
    $region22: #{tpu_custom_call.1} parent=1 // pred_check
      _
    $region23: #{tpu_custom_call.1} parent=1 // pred_check_branch
      %114 = sbr.rel (0) target = $region25
    $region24: #{tpu_custom_call.1} parent=1 // pred_region
      %s116 = ssub.s32 128, 128
      %117 = vsyncadd [#allocation4], %s116
      %s119 = sshll.u32 [#allocation7], 4
      %s120 = int_to_ptr.vmem [resolvable:$true] %s119
      %122 = dma.vmem_to_hbm [thread:$0]  %s120, 128, %s2, [#allocation4]
    $region25: #{tpu_custom_call.1} parent=1 // pred_fallthru
      _
    // Predicated region
    $region26: #{tpu_custom_call.1} parent=1 // pred_check
      _
    $region27: #{tpu_custom_call.1} parent=1 // pred_check_branch
      %124 = sbr.rel (0) target = $region29
    $region28: #{tpu_custom_call.1} parent=1 // pred_region
      %125 = dma.done [#allocation4], 128
    $region29: #{tpu_custom_call.1} parent=1 // pred_fallthru
      _
    %126 = vsyncpa [#allocation3], 1
    %127 = vsyncpa [#allocation6], 1
    %128 = vsyncpa [#allocation4], 1

</llo_original>
